<compile_context>
chip_gen: v5e
topology: v5e:2x2
jax: 0.10.0
libtpu: 0.0.40
codegen_flags: <defaults>
</compile_context>

<pallas_src>
import functools

import jax
import jax.numpy as jnp
from jax.experimental import pallas as pl
from jax.experimental.pallas import tpu as pltpu


def _round_up(x: int, m: int) -> int:
    return (x + m - 1) // m * m


# Conservative per-tile VMEM budget for 2 inputs x 2 pipeline buffers.
# Fits v5e's 16 MiB and v7x's 32 MiB default scoped-VMEM limits with headroom,
# so no vmem_limit_bytes override is needed.
_VMEM_TILE_BUDGET = 8 * 1024 * 1024


def _distill_loss_kernel(v_ref, b_ref, o_ref, *, inv_t: float):
    # (tb, D) tiles with D on the lane axis.  Compute in f32 regardless of the
    # input dtype (bf16 inputs are upcast in-register, not in HBM).
    v = v_ref[...].astype(jnp.float32) * inv_t
    b = b_ref[...].astype(jnp.float32) * inv_t

    # Pieces of log_softmax(v): shifted logits and per-row log-sum-exp.
    v_max = jnp.max(v, axis=-1, keepdims=True)
    v_sh = v - v_max
    v_lse = jnp.log(jnp.sum(jnp.exp(v_sh), axis=-1, keepdims=True))    # (tb, 1)

    # Unnormalized softmax(b).  Keep the max subtraction for overflow safety
    # even though q is never explicitly normalized.
    b_max = jnp.max(b, axis=-1, keepdims=True)
    b_exp = jnp.exp(b - b_max)                                         # (tb, D)
    s_b = jnp.sum(b_exp, axis=-1, keepdims=True)                       # (tb, 1)

    # Fused loss:  -sum((v_sh - v_lse) * b_exp / s_b)
    #            =  v_lse - sum(v_sh * b_exp) / s_b
    num = jnp.sum(v_sh * b_exp, axis=-1, keepdims=True)                # (tb, 1)
    o_ref[...] = v_lse - num * pl.reciprocal(s_b, approx=True)

    # TODO(synk): for vocab-scale D, add a second grid axis over D with online
    # (flash-style) running max / sum-of-exp so a full row never has to fit in
    # VMEM at once.


def distill_loss(vision_state: jax.Array,
                 brain_state: jax.Array,
                 t: float = 3.0,
                 block_rows: int = 512) -> jax.Array:
    """Pallas implementation of DistillLoss.forward. Returns a scalar f32."""
    assert vision_state.shape == brain_state.shape
    # Flatten any leading dims so the kernel always sees (B, D); the softmax
    # axis (-1) and the mean over all other axes are preserved exactly.
    d = vision_state.shape[-1]
    v2 = vision_state.reshape(-1, d)
    b2 = brain_state.reshape(-1, d)
    B, D = v2.shape

    # Sublane granularity: 8 rows for 32-bit inputs, 16 for 16-bit inputs.
    itemsize = max(v2.dtype.itemsize, b2.dtype.itemsize)
    sub = 8 if itemsize >= 4 else 16

    # 2 inputs x 2 pipeline buffers x (tb, D) must stay within the VMEM budget.
    bytes_per_row = 2 * 2 * D * itemsize
    max_tb = max(sub, (_VMEM_TILE_BUDGET // bytes_per_row) // sub * sub)
    tb = min(_round_up(block_rows, sub), max_tb, _round_up(B, sub))

    # Pad the row dim to a multiple of tb.  Padded (zero) rows produce finite
    # per-row losses that are sliced off before the mean, so they never affect
    # the result.
    B_pad = _round_up(B, tb)
    if B_pad != B:
        v2 = jnp.pad(v2, ((0, B_pad - B), (0, 0)))
        b2 = jnp.pad(b2, ((0, B_pad - B), (0, 0)))
    num_blocks = B_pad // tb

    row_losses = pl.pallas_call(
        functools.partial(_distill_loss_kernel, inv_t=1.0 / float(t)),
        out_shape=jax.ShapeDtypeStruct((B_pad, 1), jnp.float32),
        grid=(num_blocks,),
        in_specs=[
            pl.BlockSpec((tb, D), lambda i: (i, 0)),
            pl.BlockSpec((tb, D), lambda i: (i, 0)),
        ],
        out_specs=pl.BlockSpec((tb, 1), lambda i: (i, 0)),
        compiler_params=pltpu.CompilerParams(
            dimension_semantics=("parallel",)),
    )(v2, b2)

    # Tiny final reduction in XLA (keeps the grid axis parallel on v7x).
    return jnp.sum(row_losses[:B, 0]) / jnp.float32(B)


def _reference_distill_loss(vision_state, brain_state, t=3.0):
    v = jax.nn.log_softmax(vision_state.astype(jnp.float32) / t, axis=-1)
    b = jax.nn.softmax(brain_state.astype(jnp.float32) / t, axis=-1)
    return -jnp.sum(v * b, axis=-1).mean()


if __name__ == "__main__":
    key = jax.random.PRNGKey(0)
    k1, k2, k3, k4 = jax.random.split(key, 4)

    # Case 1: small single-block case (batch=8, hidden=128).
    v_a = jax.random.normal(k1, (8, 128), dtype=jnp.float32)
    b_a = jax.random.normal(k2, (8, 128), dtype=jnp.float32)
    loss_a = jax.block_until_ready(jax.jit(distill_loss)(v_a, b_a))
    ref_a = _reference_distill_loss(v_a, b_a)
    # Tolerance accounts for the approx EUP reciprocal in the denominator.
    assert jnp.allclose(loss_a, ref_a, atol=1e-3, rtol=1e-3), (loss_a, ref_a)

    # Case 2: 3-D input (batch=4, seq=150, hidden=256) -> multi-block grid with
    # a padded final row block (exercises tiling + padding + parallel grid).
    v_b = jax.random.normal(k3, (4, 150, 256), dtype=jnp.float32)
    b_b = jax.random.normal(k4, (4, 150, 256), dtype=jnp.float32)
    f = jax.jit(functools.partial(distill_loss, block_rows=128))
    loss_b = jax.block_until_ready(f(v_b, b_b))
    ref_b = _reference_distill_loss(v_b, b_b)
    assert jnp.allclose(loss_b, ref_b, atol=1e-3, rtol=1e-3), (loss_b, ref_b)

    print("KERNEL_OK")
</pallas_src>

<mosaic_0001>
module attributes {stable_mosaic.version = 11 : i64} {
  func.func @_distill_loss_kernel(%arg0: i32, %arg1: memref<8x128xf32, #tpu.memory_space<vmem>>, %arg2: memref<8x128xf32, #tpu.memory_space<vmem>>, %arg3: memref<8x1xf32, #tpu.memory_space<vmem>>) attributes {dimension_semantics = [#tpu.dimension_semantics<parallel>], iteration_bounds = array<i64: 1>, scalar_prefetch = 0 : i64, scratch_operands = 0 : i64, tpu.core_type = #tpu.core_type<tc>, window_params = [{transform_indices = @transform_0, window_bounds = array<i64: 8, 128>}, {transform_indices = @transform_1, window_bounds = array<i64: 8, 128>}, {transform_indices = @transform_2, window_bounds = array<i64: 8, 1>}]} {
    %c0 = arith.constant 0 : index
    %c0_0 = arith.constant 0 : index
    %0 = vector.load %arg1[%c0, %c0_0] : memref<8x128xf32, #tpu.memory_space<vmem>>, vector<8x128xf32>
    %cst = arith.constant 0.333333343 : f32
    %1 = vector.broadcast %cst : f32 to vector<8x128xf32>
    %2 = arith.mulf %0, %1 : vector<8x128xf32>
    %c0_1 = arith.constant 0 : index
    %c0_2 = arith.constant 0 : index
    %3 = vector.load %arg2[%c0_1, %c0_2] : memref<8x128xf32, #tpu.memory_space<vmem>>, vector<8x128xf32>
    %cst_3 = arith.constant 0.333333343 : f32
    %4 = vector.broadcast %cst_3 : f32 to vector<8x128xf32>
    %5 = arith.mulf %3, %4 : vector<8x128xf32>
    %cst_4 = arith.constant dense<0xFF800000> : vector<8xf32>
    %6 = vector.multi_reduction <maximumf>, %2, %cst_4 [1] : vector<8x128xf32> to vector<8xf32>
    %7 = vector.shape_cast %6 : vector<8xf32> to vector<8x1xf32>
    %8 = vector.broadcast %7 : vector<8x1xf32> to vector<8x128xf32>
    %9 = arith.subf %2, %8 : vector<8x128xf32>
    %10 = math.exp %9 : vector<8x128xf32>
    %cst_5 = arith.constant dense<0.000000e+00> : vector<8xf32>
    %11 = vector.multi_reduction <add>, %10, %cst_5 [1] : vector<8x128xf32> to vector<8xf32>
    %12 = vector.shape_cast %11 : vector<8xf32> to vector<8x1xf32>
    %13 = math.log %12 : vector<8x1xf32>
    %cst_6 = arith.constant dense<0xFF800000> : vector<8xf32>
    %14 = vector.multi_reduction <maximumf>, %5, %cst_6 [1] : vector<8x128xf32> to vector<8xf32>
    %15 = vector.shape_cast %14 : vector<8xf32> to vector<8x1xf32>
    %16 = vector.broadcast %15 : vector<8x1xf32> to vector<8x128xf32>
    %17 = arith.subf %5, %16 : vector<8x128xf32>
    %18 = math.exp %17 : vector<8x128xf32>
    %cst_7 = arith.constant dense<0.000000e+00> : vector<8xf32>
    %19 = vector.multi_reduction <add>, %18, %cst_7 [1] : vector<8x128xf32> to vector<8xf32>
    %20 = vector.shape_cast %19 : vector<8xf32> to vector<8x1xf32>
    %21 = arith.mulf %9, %18 : vector<8x128xf32>
    %cst_8 = arith.constant dense<0.000000e+00> : vector<8xf32>
    %22 = vector.multi_reduction <add>, %21, %cst_8 [1] : vector<8x128xf32> to vector<8xf32>
    %23 = vector.shape_cast %22 : vector<8xf32> to vector<8x1xf32>
    %24 = tpu.reciprocal %20 {approx = true} : vector<8x1xf32> -> vector<8x1xf32>
    %25 = arith.mulf %23, %24 : vector<8x1xf32>
    %26 = arith.subf %13, %25 : vector<8x1xf32>
    %c0_9 = arith.constant 0 : index
    %c0_10 = arith.constant 0 : index
    %27 = vector.load %arg3[%c0_9, %c0_10] : memref<8x1xf32, #tpu.memory_space<vmem>>, vector<8x1xf32>
    tpu.vector_store %arg3[%c0_9, %c0_10], %26 {strides = array<i32>} : memref<8x1xf32, #tpu.memory_space<vmem>>, vector<8x1xf32>,
    return
  }
  func.func @transform_0(%arg0: i32) -> (i32, i32) {
    %c0_i32 = arith.constant 0 : i32
    %c0_i32_0 = arith.constant 0 : i32
    return %arg0, %c0_i32 : i32, i32
  }
  func.func @transform_1(%arg0: i32) -> (i32, i32) {
    %c0_i32 = arith.constant 0 : i32
    %c0_i32_0 = arith.constant 0 : i32
    return %arg0, %c0_i32 : i32, i32
  }
  func.func @transform_2(%arg0: i32) -> (i32, i32) {
    %c0_i32 = arith.constant 0 : i32
    %c0_i32_0 = arith.constant 0 : i32
    return %arg0, %c0_i32 : i32, i32
  }
}

</mosaic_0001>

<llo_original>
// kernel: distill_loss.1
$region0: #{distill_loss.1}
  #allocation0 [shape = 'u32[]', space=smem, size = 0x4, offset = 0x4, fixed_abs, tag = 'smem constant byte address 0x4 - core index']
  #allocation1 [shape = 'u32[72,128]{1,0:T(1,128)}', space=vmem, size = 0x9000, scoped, tag = 'internal scratch']
  %s0 = inlined_call_operand.hbm [shape: f32[8,128], index: 0, kind: input, shape index: {}]
  %s1 = inlined_call_operand.hbm [shape: f32[8,128], index: 1, kind: input, shape index: {}]
  %s2 = inlined_call_operand.vmem [shape: f32[8,1], index: 2, kind: output, shape index: {}]
  %s3 = sld [smem:[#allocation0]]
  $region26: #{distill_loss.1} parent=0
    _
  %s5 = ssub.s32 1, %s3
  %s6 = scalar_select 0, %s5, %s3
  $region1: #{distill_loss.1} parent=0
    #allocation2 [shape = 'u8[4096]{0}', space=vmem, size = 0x1000, scoped, tag = 'input window, operand 0, single buffered']
    #allocation3 [shape = 's32[1]{0}', space=sflag, size = 0x4, scoped, tag = 'scoped memory for distill_loss.1']
    #allocation4 [shape = 'u8[4096]{0}', space=vmem, size = 0x1000, scoped, tag = 'input window, operand 1, single buffered']
    #allocation5 [shape = 's32[1]{0}', space=sflag, size = 0x4, scoped, tag = 'scoped memory for distill_loss.1']
    %7 = vsyncpa [#allocation3], 0
    %8 = vsyncpa [#allocation5], 0
    // Predicated region
    $region2: #{distill_loss.1} parent=1 // pred_check
      _
    $region3: #{distill_loss.1} parent=1 // pred_check_branch
      %10 = sbr.rel (0) target = $region5
    $region4: #{distill_loss.1} parent=1 // pred_region
      %12 = vsyncadd [#allocation3], 0
      %s14 = sshll.u32 %s0, 4
      %s15 = int_to_ptr.hbm [resolvable:$true] %s14
      %s16 = sshll.u32 [#allocation2], 4
      %s17 = int_to_ptr.vmem [resolvable:$true] %s16
      %19 = dma.hbm_to_vmem [thread:$0]  %s15, 128, %s17, [#allocation3]
    $region5: #{distill_loss.1} parent=1 // pred_fallthru
      _
    // Predicated region
    $region6: #{distill_loss.1} parent=1 // pred_check
      _
    $region7: #{distill_loss.1} parent=1 // pred_check_branch
      %21 = sbr.rel (0) target = $region9
    $region8: #{distill_loss.1} parent=1 // pred_region
      %23 = vsyncadd [#allocation5], 0
      %s25 = sshll.u32 %s1, 4
      %s26 = int_to_ptr.hbm [resolvable:$true] %s25
      %s27 = sshll.u32 [#allocation4], 4
      %s28 = int_to_ptr.vmem [resolvable:$true] %s27
      %30 = dma.hbm_to_vmem [thread:$0]  %s26, 128, %s28, [#allocation5]
    $region9: #{distill_loss.1} parent=1 // pred_fallthru
      _
    // Predicated region
    $region10: #{distill_loss.1} parent=1 // pred_check
      _
    $region11: #{distill_loss.1} parent=1 // pred_check_branch
      %32 = sbr.rel (0) target = $region13
    $region12: #{distill_loss.1} parent=1 // pred_region
      %34 = dma.done [#allocation3], 128
    $region13: #{distill_loss.1} parent=1 // pred_fallthru
      _
    // Predicated region
    $region14: #{distill_loss.1} parent=1 // pred_check
      _
    $region15: #{distill_loss.1} parent=1 // pred_check_branch
      %36 = sbr.rel (0) target = $region17
    $region16: #{distill_loss.1} parent=1 // pred_region
      %38 = dma.done [#allocation5], 128
    $region17: #{distill_loss.1} parent=1 // pred_fallthru
      _
    %v39 = vld [vmem:[#allocation2] sm:$0xff]
    %v40 = vmul.f32 %v39, 0.33333334
    %v41 = vld [vmem:[#allocation4] sm:$0xff]
    %v42 = vmul.f32 %v41, 0.33333334
    %43 = vmax.xlane.f32.xlu0 %v40
    %v44 = vpop.xlane.xlu0 %43
    %v45 = vsub.f32 %v40, %v44
    %v46 = vmul.f32 %v45, 1.442695
    %v47 = vpow.pop %v46
    %48 = vadd.xlane.f32.xlu0 %v47
    %v49 = vpop.xlane.xlu0 %48
    %v50 = vlog2.pop %v49
    %v51 = vmul.f32 %v50, 0.6931472
    %52 = vmax.xlane.f32.xlu0 %v42
    %v53 = vpop.xlane.xlu0 %52
    %v54 = vsub.f32 %v42, %v53
    %v55 = vmul.f32 %v54, 1.442695
    %v56 = vpow.pop %v55
    %57 = vadd.xlane.f32.xlu0 %v56
    %v58 = vpop.xlane.xlu0 %57
    %v59 = vmul.f32 %v45, %v56
    %60 = vadd.xlane.f32.xlu0 %v59
    %v61 = vpop.xlane.xlu0 %60
    %v62 = vrcp.pop %v58
    %v63 = vmul.f32 %v61, %v62
    %v64 = vsub.f32 %v51, %v63
    %vm65 = vcmask 7168
    %66 = vst.msk [vmem:[%s2] sm:$0xff] %vm65, %v64
    // Predicated region
    $region18: #{distill_loss.1} parent=1 // pred_check
      _
    $region19: #{distill_loss.1} parent=1 // pred_check_branch
      %68 = sbr.rel (0) target = $region21
    $region20: #{distill_loss.1} parent=1 // pred_region
      _
    $region21: #{distill_loss.1} parent=1 // pred_fallthru
      _
    // Predicated region
    $region22: #{distill_loss.1} parent=1 // pred_check
      _
    $region23: #{distill_loss.1} parent=1 // pred_check_branch
      %70 = sbr.rel (0) target = $region25
    $region24: #{distill_loss.1} parent=1 // pred_region
      _
    $region25: #{distill_loss.1} parent=1 // pred_fallthru
      _
    %71 = vsyncpa [#allocation3], 1
    %72 = vsyncpa [#allocation5], 1

</llo_original>
